<compile_context>
chip_gen: v7x
topology: tpu7x:2x2x1
jax: 0.10.0
libtpu: 0.0.40
codegen_flags: <defaults>
</compile_context>

<pallas_src>
import functools

import jax
import jax.numpy as jnp
from jax.experimental import pallas as pl
from jax.experimental.pallas import tpu as pltpu

GAMMA_NEG = 4.0
GAMMA_POS = 1.0
CLIP = 0.05
EPS = 1e-8


def _int_pow(base, n):
    """base ** n for a static non-negative integer n (exponentiation by squaring)."""
    n = int(n)
    if n == 0:
        return jnp.ones_like(base)
    result = None
    cur = base
    while n > 0:
        if n & 1:
            result = cur if result is None else result * cur
        n >>= 1
        if n > 0:
            cur = cur * cur
    return result


def _asl_kernel(x_ref, y_ref, o_ref, *, gamma_neg, gamma_pos, clip, eps,
                rows, cols, row_block, col_block, fold_rows, fast_binary):
    x = x_ref[...].astype(jnp.float32)
    y = y_ref[...].astype(jnp.float32)

    xs_pos = jax.nn.sigmoid(x)
    xs_neg = 1.0 - xs_pos
    if clip is not None and clip > 0:
        # matches torch: xs_neg.add_(clip).clamp_(max=1)
        xs_neg = jnp.minimum(xs_neg + clip, 1.0)

    if fast_binary:
        # Hard {0,1} targets + non-negative integer gammas:
        # one log per element and integer pow by repeated multiply (no EUP pow).
        is_pos = y > 0.5
        p = jnp.where(is_pos, xs_pos, xs_neg)
        loss = jnp.log(jnp.maximum(p, eps))
        if gamma_neg > 0 or gamma_pos > 0:
            base = 1.0 - p
            w = jnp.where(is_pos,
                          _int_pow(base, gamma_pos),
                          _int_pow(base, gamma_neg))
            loss = loss * w
    else:
        # General formula (soft targets / non-integer gammas), mirrors torch.
        anti = 1.0 - y
        loss = (y * jnp.log(jnp.maximum(xs_pos, eps))
                + anti * jnp.log(jnp.maximum(xs_neg, eps)))
        if gamma_neg > 0 or gamma_pos > 0:
            xp = xs_pos * y
            xn = xs_neg * anti
            w = jnp.power(1.0 - xp - xn, gamma_pos * y + gamma_neg * anti)
            loss = loss * w

    # Mask out-of-range rows/cols of partial tiles (only emitted when ragged).
    valid = None
    if rows % row_block != 0:
        r = (jax.lax.broadcasted_iota(jnp.int32, loss.shape, 0)
             + pl.program_id(0) * row_block)
        valid = r < rows
    if cols % col_block != 0:
        c = (jax.lax.broadcasted_iota(jnp.int32, loss.shape, 1)
             + pl.program_id(1) * col_block)
        vc = c < cols
        valid = vc if valid is None else (valid & vc)
    if valid is not None:
        loss = jnp.where(valid, loss, 0.0)

    # Fold rows down to `fold_rows` sublanes: pure vreg adds, no cross-lane work,
    # and a lane-dense (fold_rows, col_block) store.
    if fold_rows == 8:
        partial = jnp.sum(loss.reshape(row_block // 8, 8, col_block), axis=0)
    else:
        partial = jnp.sum(loss, axis=0, keepdims=True)
    o_ref[...] = partial


def asymmetric_loss(x, y, *, gamma_neg=GAMMA_NEG, gamma_pos=GAMMA_POS,
                    clip=CLIP, eps=EPS, assume_binary_targets=True,
                    target_block_bytes=2 << 20, max_col_block=8192):
    """Computes AsymmetricLossOptimized.forward(x, y) == -loss.sum() (a scalar)."""
    assert x.shape == y.shape and x.ndim == 2
    B, C = x.shape

    # ---- tile selection (large, lane-dense blocks, VMEM-budget aware) ------
    if C <= max_col_block:
        col_block, nc = C, 1                        # full-C block (no lane mask)
    else:
        col_block = max_col_block                   # multiple of 128 lanes
        nc = pl.cdiv(C, col_block)
    # Budget the f32 working set (intermediates are f32 regardless of input
    # dtype), so bf16 inputs don't blow up the in-kernel VMEM footprint.
    bytes_per_row_f32 = col_block * 4

    if B < 8 or B * bytes_per_row_f32 <= target_block_bytes:
        row_block, nr = B, 1                        # single full-B row block
    else:
        row_block = max(8, (target_block_bytes // bytes_per_row_f32) // 8 * 8)
        row_block = min(row_block, (B // 8) * 8)
        nr = pl.cdiv(B, row_block)

    fold_rows = 8 if row_block % 8 == 0 else 1

    fast_binary = (assume_binary_targets
                   and float(gamma_pos) == int(gamma_pos) and gamma_pos >= 0
                   and float(gamma_neg) == int(gamma_neg) and gamma_neg >= 0)

    kernel = functools.partial(
        _asl_kernel, gamma_neg=gamma_neg, gamma_pos=gamma_pos, clip=clip,
        eps=eps, rows=B, cols=C, row_block=row_block, col_block=col_block,
        fold_rows=fold_rows, fast_binary=fast_binary)

    partials = pl.pallas_call(
        kernel,
        out_shape=jax.ShapeDtypeStruct((nr * fold_rows, nc * col_block),
                                       jnp.float32),
        grid_spec=pltpu.PrefetchScalarGridSpec(
            num_scalar_prefetch=0,
            grid=(nr, nc),
            in_specs=[
                pl.BlockSpec((row_block, col_block), lambda i, j: (i, j)),
                pl.BlockSpec((row_block, col_block), lambda i, j: (i, j)),
            ],
            out_specs=pl.BlockSpec((fold_rows, col_block), lambda i, j: (i, j)),
        ),
        compiler_params=pltpu.CompilerParams(
            dimension_semantics=("parallel", "parallel"),
            vmem_limit_bytes=32 * 1024 * 1024,
        ),
    )(x, y)

    # Tiny final reduction of the lane-dense partials in plain XLA.
    return -jnp.sum(partials)


def asymmetric_loss_ref(x, y, *, gamma_neg=GAMMA_NEG, gamma_pos=GAMMA_POS,
                        clip=CLIP, eps=EPS):
    x = x.astype(jnp.float32)
    y = y.astype(jnp.float32)
    anti = 1.0 - y
    xs_pos = jax.nn.sigmoid(x)
    xs_neg = 1.0 - xs_pos
    if clip is not None and clip > 0:
        xs_neg = jnp.minimum(xs_neg + clip, 1.0)
    loss = (y * jnp.log(jnp.maximum(xs_pos, eps))
            + anti * jnp.log(jnp.maximum(xs_neg, eps)))
    if gamma_neg > 0 or gamma_pos > 0:
        w = jnp.power(1.0 - xs_pos * y - xs_neg * anti,
                      gamma_pos * y + gamma_neg * anti)
        loss = loss * w
    return -loss.sum()


if __name__ == "__main__":
    key = jax.random.PRNGKey(0)
    kx, ky = jax.random.split(key)

    # Case 1: small multi-label batch, fast (binary-target) path, single block.
    B, C = 16, 128
    x = jax.random.normal(kx, (B, C), dtype=jnp.float32) * 2.0
    y = (jax.random.uniform(ky, (B, C)) < 0.3).astype(jnp.float32)
    out = jax.block_until_ready(asymmetric_loss(x, y))
    ref = jax.block_until_ready(asymmetric_loss_ref(x, y))
    assert jnp.allclose(out, ref, rtol=1e-5, atol=1e-3), (out, ref)

    # Case 2: ragged batch with a tiny forced tile to exercise the
    # multi-step grid + partial-tile row-mask path.
    B2, C2 = 20, 128
    x2 = jax.random.normal(kx, (B2, C2), dtype=jnp.float32) * 2.0
    y2 = (jax.random.uniform(ky, (B2, C2)) < 0.3).astype(jnp.float32)
    out2 = jax.block_until_ready(
        asymmetric_loss(x2, y2, target_block_bytes=8 * 128 * 4))
    ref2 = jax.block_until_ready(asymmetric_loss_ref(x2, y2))
    assert jnp.allclose(out2, ref2, rtol=1e-5, atol=1e-3), (out2, ref2)

    # Case 3: general (non-binary-assumption) fallback path still matches.
    out3 = jax.block_until_ready(
        asymmetric_loss(x, y, assume_binary_targets=False))
    assert jnp.allclose(out3, ref, rtol=1e-5, atol=1e-3), (out3, ref)

    print("KERNEL_OK")
</pallas_src>

<mosaic_0001>
module attributes {stable_mosaic.version = 11 : i64} {
  func.func @_asl_kernel(%arg0: i32, %arg1: i32, %arg2: memref<16x128xf32, #tpu.memory_space<vmem>>, %arg3: memref<16x128xf32, #tpu.memory_space<vmem>>, %arg4: memref<8x128xf32, #tpu.memory_space<vmem>>) attributes {dimension_semantics = [#tpu.dimension_semantics<parallel>, #tpu.dimension_semantics<parallel>], iteration_bounds = array<i64: 1, 1>, scalar_prefetch = 0 : i64, scratch_operands = 0 : i64, tpu.core_type = #tpu.core_type<tc>, window_params = [{transform_indices = @transform_0, window_bounds = array<i64: 16, 128>}, {transform_indices = @transform_1, window_bounds = array<i64: 16, 128>}, {transform_indices = @transform_2, window_bounds = array<i64: 8, 128>}]} {
    %c0 = arith.constant 0 : index
    %c0_0 = arith.constant 0 : index
    %0 = vector.load %arg2[%c0, %c0_0] : memref<16x128xf32, #tpu.memory_space<vmem>>, vector<16x128xf32>
    %c0_1 = arith.constant 0 : index
    %c0_2 = arith.constant 0 : index
    %1 = vector.load %arg3[%c0_1, %c0_2] : memref<16x128xf32, #tpu.memory_space<vmem>>, vector<16x128xf32>
    %2 = arith.negf %0 : vector<16x128xf32>
    %3 = math.exp %2 : vector<16x128xf32>
    %cst = arith.constant 1.000000e+00 : f32
    %4 = vector.broadcast %cst : f32 to vector<16x128xf32>
    %5 = arith.addf %4, %3 : vector<16x128xf32>
    %6 = arith.divf %4, %5 : vector<16x128xf32>
    %cst_3 = arith.constant 1.000000e+00 : f32
    %7 = vector.broadcast %cst_3 : f32 to vector<16x128xf32>
    %8 = arith.subf %7, %6 : vector<16x128xf32>
    %cst_4 = arith.constant 5.000000e-02 : f32
    %9 = vector.broadcast %cst_4 : f32 to vector<16x128xf32>
    %10 = arith.addf %8, %9 : vector<16x128xf32>
    %cst_5 = arith.constant 1.000000e+00 : f32
    %11 = vector.broadcast %cst_5 : f32 to vector<16x128xf32>
    %12 = arith.minimumf %10, %11 : vector<16x128xf32>
    %cst_6 = arith.constant 5.000000e-01 : f32
    %13 = vector.broadcast %cst_6 : f32 to vector<16x128xf32>
    %14 = arith.cmpf ogt, %1, %13 : vector<16x128xf32>
    %15 = arith.select %14, %6, %12 : vector<16x128xi1>, vector<16x128xf32>
    %cst_7 = arith.constant 9.99999993E-9 : f32
    %16 = vector.broadcast %cst_7 : f32 to vector<16x128xf32>
    %17 = arith.maximumf %15, %16 : vector<16x128xf32>
    %18 = math.log %17 : vector<16x128xf32>
    %cst_8 = arith.constant 1.000000e+00 : f32
    %19 = vector.broadcast %cst_8 : f32 to vector<16x128xf32>
    %20 = arith.subf %19, %15 : vector<16x128xf32>
    %21 = arith.mulf %20, %20 : vector<16x128xf32>
    %22 = arith.mulf %21, %21 : vector<16x128xf32>
    %23 = arith.select %14, %20, %22 : vector<16x128xi1>, vector<16x128xf32>
    %24 = arith.mulf %18, %23 : vector<16x128xf32>
    %25 = vector.shape_cast %24 : vector<16x128xf32> to vector<2x8x128xf32>
    %cst_9 = arith.constant dense<0.000000e+00> : vector<8x128xf32>
    %26 = vector.multi_reduction <add>, %25, %cst_9 [0] : vector<2x8x128xf32> to vector<8x128xf32>
    %c0_10 = arith.constant 0 : index
    %c0_11 = arith.constant 0 : index
    %27 = vector.load %arg4[%c0_10, %c0_11] : memref<8x128xf32, #tpu.memory_space<vmem>>, vector<8x128xf32>
    tpu.vector_store %arg4[%c0_10, %c0_11], %26 {strides = array<i32>} : memref<8x128xf32, #tpu.memory_space<vmem>>, vector<8x128xf32>,
    return
  }
  func.func @transform_0(%arg0: i32, %arg1: i32) -> (i32, i32) {
    %c0_i32 = arith.constant 0 : i32
    return %arg0, %arg1 : i32, i32
  }
  func.func @transform_1(%arg0: i32, %arg1: i32) -> (i32, i32) {
    %c0_i32 = arith.constant 0 : i32
    return %arg0, %arg1 : i32, i32
  }
  func.func @transform_2(%arg0: i32, %arg1: i32) -> (i32, i32) {
    %c0_i32 = arith.constant 0 : i32
    return %arg0, %arg1 : i32, i32
  }
}

</mosaic_0001>

<llo_original>
// kernel: tpu_custom_call.1
$region0: #{tpu_custom_call.1}
  #allocation0 [shape = 'u32[]', space=smem, size = 0x4, offset = 0x4, fixed_abs, tag = 'smem constant byte address 0x4 - core index']
  #allocation1 [shape = 'u32[144,128]{1,0:T(1,128)}', space=vmem, size = 0x12000, scoped, tag = 'internal scratch']
  %s0 = inlined_call_operand.hbm [shape: f32[16,128], index: 0, kind: input, shape index: {}]
  %s1 = inlined_call_operand.hbm [shape: f32[16,128], index: 1, kind: input, shape index: {}]
  %s2 = inlined_call_operand.hbm [shape: f32[8,128], index: 2, kind: output, shape index: {}]
  %s3 = sld [smem:[#allocation0]]
  $region26: #{tpu_custom_call.1} parent=0
    _
  %s5 = ssub.s32 1, %s3
  %s6 = scalar_select 0, %s5, %s3
  $region1: #{tpu_custom_call.1} parent=0
    #allocation2 [shape = 'u8[8192]{0}', space=vmem, size = 0x2000, scoped, tag = 'input window, operand 0, single buffered']
    #allocation3 [shape = 's32[1]{0}', space=sflag, size = 0x4, scoped, tag = 'scoped memory for tpu_custom_call.1']
    #allocation4 [shape = 's32[1]{0}', space=sflag, size = 0x4, scoped, tag = 'scoped memory for tpu_custom_call.1']
    #allocation5 [shape = 'u8[8192]{0}', space=vmem, size = 0x2000, scoped, tag = 'input window, operand 1, single buffered']
    #allocation6 [shape = 's32[1]{0}', space=sflag, size = 0x4, scoped, tag = 'scoped memory for tpu_custom_call.1']
    #allocation7 [shape = 'u8[4096]{0}', space=vmem, size = 0x1000, scoped, tag = 'output window, operand 0, single buffered']
    %7 = vsyncpa [#allocation3], 0
    %8 = vsyncpa [#allocation6], 0
    %9 = vsyncpa [#allocation4], 0
    // Predicated region
    $region2: #{tpu_custom_call.1} parent=1 // pred_check
      _
    $region3: #{tpu_custom_call.1} parent=1 // pred_check_branch
      %11 = sbr.rel (0) target = $region5
    $region4: #{tpu_custom_call.1} parent=1 // pred_region
      %s13 = ssub.s32 256, 256
      %14 = vsyncadd [#allocation3], %s13
      %s15 = sshll.u32 [#allocation2], 4
      %s16 = int_to_ptr.vmem [resolvable:$true] %s15
      %21 = dma.hbm_to_vmem [thread:$0]  %s0, 256, %s16, [#allocation3], 128, 128, 8
    $region5: #{tpu_custom_call.1} parent=1 // pred_fallthru
      _
    // Predicated region
    $region6: #{tpu_custom_call.1} parent=1 // pred_check
      _
    $region7: #{tpu_custom_call.1} parent=1 // pred_check_branch
      %23 = sbr.rel (0) target = $region9
    $region8: #{tpu_custom_call.1} parent=1 // pred_region
      %s25 = ssub.s32 256, 256
      %26 = vsyncadd [#allocation6], %s25
      %s27 = sshll.u32 [#allocation5], 4
      %s28 = int_to_ptr.vmem [resolvable:$true] %s27
      %33 = dma.hbm_to_vmem [thread:$0]  %s1, 256, %s28, [#allocation6], 128, 128, 8
    $region9: #{tpu_custom_call.1} parent=1 // pred_fallthru
      _
    // Predicated region
    $region10: #{tpu_custom_call.1} parent=1 // pred_check
      _
    $region11: #{tpu_custom_call.1} parent=1 // pred_check_branch
      %35 = sbr.rel (0) target = $region13
    $region12: #{tpu_custom_call.1} parent=1 // pred_region
      %36 = dma.done [#allocation3], 256
    $region13: #{tpu_custom_call.1} parent=1 // pred_fallthru
      _
    // Predicated region
    $region14: #{tpu_custom_call.1} parent=1 // pred_check
      _
    $region15: #{tpu_custom_call.1} parent=1 // pred_check_branch
      %38 = sbr.rel (0) target = $region17
    $region16: #{tpu_custom_call.1} parent=1 // pred_region
      %39 = dma.done [#allocation6], 256
    $region17: #{tpu_custom_call.1} parent=1 // pred_fallthru
      _
    %v40 = vld [vmem:[#allocation2] sm:$0xff]
    %v41 = vld [vmem:[#allocation2 + $0x8] sm:$0xff]
    %v42 = vld [vmem:[#allocation5] sm:$0xff]
    %v43 = vld [vmem:[#allocation5 + $0x8] sm:$0xff]
    %v44 = vxor.u32 %v40, 2147483648
    %v45 = vxor.u32 %v41, 2147483648
    %v46 = vmul.f32 %v44, 1.442695
    %v47 = vpow.pop %v46
    %v48 = vmul.f32 %v45, 1.442695
    %v49 = vpow.pop %v48
    %v50 = vadd.f32 %v47, 1.0
    %v51 = vadd.f32 %v49, 1.0
    %v52 = vrcp.pop %v50
    %v53 = vmul.f32 1.0, %v52
    %v54 = vrcp.pop %v51
    %v55 = vmul.f32 1.0, %v54
    %v56 = vsub.f32 1.0, %v53
    %v57 = vsub.f32 1.0, %v55
    %v58 = vadd.f32 %v56, 0.05
    %v59 = vadd.f32 %v57, 0.05
    %v60 = vmin.f32 %v58, 1.0
    %v61 = vmin.f32 %v59, 1.0
    %vm62 = vcmp.gt.f32.partialorder %v42, 0.5
    %vm63 = vcmp.gt.f32.partialorder %v43, 0.5
    %v64 = vsel %vm62, %v53, %v60
    %v65 = vsel %vm63, %v55, %v61
    %v66 = vmax.f32 %v64, 1e-08
    %v67 = vmax.f32 %v65, 1e-08
    %v68 = vlog2.pop %v66
    %v69 = vmul.f32 %v68, 0.6931472
    %v70 = vlog2.pop %v67
    %v71 = vmul.f32 %v70, 0.6931472
    %v72 = vsub.f32 1.0, %v64
    %v73 = vsub.f32 1.0, %v65
    %v74 = vmul.f32 %v72, %v72
    %v75 = vmul.f32 %v73, %v73
    %v76 = vmul.f32 %v74, %v74
    %v77 = vmul.f32 %v75, %v75
    %v78 = vsel %vm62, %v72, %v76
    %v79 = vsel %vm63, %v73, %v77
    %v80 = vmul.f32 %v69, %v78
    %v81 = vmul.f32 %v71, %v79
    %v82 = vadd.f32 %v80, %v81
    %83 = vst [vmem:[#allocation7] sm:$0xff] %v82
    // Predicated region
    $region18: #{tpu_custom_call.1} parent=1 // pred_check
      _
    $region19: #{tpu_custom_call.1} parent=1 // pred_check_branch
      %85 = sbr.rel (0) target = $region21
    $region20: #{tpu_custom_call.1} parent=1 // pred_region
      %s87 = ssub.s32 128, 128
      %88 = vsyncadd [#allocation4], %s87
      %s90 = sshll.u32 [#allocation7], 4
      %s91 = int_to_ptr.vmem [resolvable:$true] %s90
      %93 = dma.vmem_to_hbm [thread:$0]  %s91, 128, %s2, [#allocation4]
    $region21: #{tpu_custom_call.1} parent=1 // pred_fallthru
      _
    // Predicated region
    $region22: #{tpu_custom_call.1} parent=1 // pred_check
      _
    $region23: #{tpu_custom_call.1} parent=1 // pred_check_branch
      %95 = sbr.rel (0) target = $region25
    $region24: #{tpu_custom_call.1} parent=1 // pred_region
      %96 = dma.done [#allocation4], 128
    $region25: #{tpu_custom_call.1} parent=1 // pred_fallthru
      _
    %97 = vsyncpa [#allocation3], 1
    %98 = vsyncpa [#allocation6], 1
    %99 = vsyncpa [#allocation4], 1

</llo_original>
